<compile_context>
chip_gen: v7x
topology: tpu7x:2x2x1
jax: 0.10.0
libtpu: 0.0.40
codegen_flags: <defaults>
</compile_context>

<pallas_src>
import jax
import jax.numpy as jnp
from jax.experimental import pallas as pl
from jax.experimental.pallas import tpu as pltpu

H = W = 16
KH = KW = 3
CIN = 3
FEAT = 128            # backbone out_features == head.in_features
NUM_CLASSES = 10
BATCH = 2

K_RAW = KH * KW * CIN  # 27 = im2col contraction depth
K_PAD = 32             # pad K only to the next sublane multiple (was 128)
NC_PAD = 128           # lane-dense padded logits width

# TODO(synk): real backbone is user-supplied (e.g. ResNet); synthetic conv
# backbone stands in so the skipped-bottleneck forward still type-checks.


def _classifier_kernel(patches_ref, wconv_ref, bconv_ref, whead_ref, bhead_ref,
                       logits_ref, feat_ref):
    # One im2col matmul for the whole batch: (M, K_PAD) x (K_PAD, FEAT).
    acc = jnp.dot(patches_ref[...], wconv_ref[...],
                  preferred_element_type=jnp.float32)
    acc = jnp.maximum(acc + bconv_ref[...], 0.0)           # conv bias + ReLU

    # Global average pool as a per-image sublane reduction (no MXU pass):
    # rows b*HW .. (b+1)*HW-1 of acc belong to image b.
    hw = H * W
    nb = acc.shape[0] // hw
    rows = [jnp.sum(acc[b * hw:(b + 1) * hw, :], axis=0, keepdims=True)
            for b in range(nb)]
    feat = jnp.concatenate(rows, axis=0) * (1.0 / float(hw))   # (B, FEAT)

    # Head: (B, FEAT) x (FEAT, NC_PAD) + bias; lane-dense 128-wide store.
    logits = jnp.dot(feat, whead_ref[...],
                     preferred_element_type=jnp.float32) + bhead_ref[...]
    feat_ref[...] = feat
    logits_ref[...] = logits


def image_classifier_forward(x_nchw, params):
    """Returns (logits (B, NUM_CLASSES), features (B, FEAT)), both float32."""
    B = x_nchw.shape[0]
    M = B * H * W                                            # batch folded into M

    # Glue (XLA side): NCHW -> NHWC, spatial zero-pad for SAME 3x3 conv,
    # then im2col so the kernel sees a lane-contiguous (M, K_PAD) patch matrix.
    x = jnp.transpose(x_nchw, (0, 2, 3, 1)).astype(jnp.float32)
    xp = jnp.pad(x, ((0, 0), (1, 1), (1, 1), (0, 0)))
    cols = [xp[:, dh:dh + H, dw:dw + W, :]
            for dh in range(KH) for dw in range(KW)]
    patches = jnp.concatenate(cols, axis=-1).reshape(M, K_RAW)
    patches = jnp.pad(patches, ((0, 0), (0, K_PAD - K_RAW)))   # (M, 32)

    vmem = pl.BlockSpec(memory_space=pltpu.MemorySpace.VMEM)
    logits_pad, feat = pl.pallas_call(
        _classifier_kernel,
        out_shape=(
            jax.ShapeDtypeStruct((B, NC_PAD), jnp.float32),
            jax.ShapeDtypeStruct((B, FEAT), jnp.float32),
        ),
        # Single invocation: no grid, no pipelining, full arrays resident in VMEM.
        in_specs=[vmem, vmem, vmem, vmem, vmem],
        out_specs=(vmem, vmem),
    )(patches, params["wconv"], params["bconv"],
      params["whead"], params["bhead"])
    return logits_pad[:, :NUM_CLASSES], feat


def init_params(key):
    k1, k2, k3, k4 = jax.random.split(key, 4)
    # PyTorch-layout conv weight (Cout, Cin, 3, 3) and Linear weight (NC, F).
    wconv_oihw = jax.random.normal(k1, (FEAT, CIN, KH, KW), jnp.float32) * 0.1
    bconv = jax.random.normal(k2, (FEAT,), jnp.float32) * 0.1
    whead_ncf = jax.random.normal(k3, (NUM_CLASSES, FEAT), jnp.float32) * 0.1
    bhead = jax.random.normal(k4, (NUM_CLASSES,), jnp.float32) * 0.1

    # Kernel layouts: im2col-folded conv weight, lane-padded head weight/bias.
    # Tap/channel ordering (dh, dw, c) matches the wrapper's concatenate order.
    wconv_kf = jnp.transpose(wconv_oihw, (2, 3, 1, 0)).reshape(K_RAW, FEAT)
    wconv = jnp.pad(wconv_kf, ((0, K_PAD - K_RAW), (0, 0)))          # (32, F)
    whead = jnp.pad(whead_ncf.T, ((0, 0), (0, NC_PAD - NUM_CLASSES)))  # (F,128)
    bhead_pad = jnp.pad(bhead, (0, NC_PAD - NUM_CLASSES)).reshape(1, NC_PAD)
    return {
        "wconv": wconv,                          # (K_PAD, FEAT)
        "bconv": bconv.reshape(1, FEAT),         # (1, FEAT)
        "whead": whead,                          # (FEAT, NC_PAD)
        "bhead": bhead_pad,                      # (1, NC_PAD)
        "_wconv_oihw": wconv_oihw, "_bconv": bconv,
        "_whead": whead_ncf, "_bhead": bhead,
    }


def reference_forward(x_nchw, params):
    conv = jax.lax.conv_general_dilated(
        x_nchw.astype(jnp.float32), params["_wconv_oihw"],
        window_strides=(1, 1), padding="SAME",
        dimension_numbers=("NCHW", "OIHW", "NCHW"))
    conv = conv + params["_bconv"].reshape(1, -1, 1, 1)
    conv = jnp.maximum(conv, 0.0)
    feat = conv.mean(axis=(2, 3))                        # (B, FEAT)
    logits = feat @ params["_whead"].T + params["_bhead"]
    return logits, feat


if __name__ == "__main__":
    key = jax.random.PRNGKey(0)
    kx, kp = jax.random.split(key)
    x = jax.random.normal(kx, (BATCH, CIN, H, W), jnp.float32)   # NCHW like PyTorch
    params = init_params(kp)

    logits, feats = image_classifier_forward(x, params)
    jax.block_until_ready((logits, feats))

    ref_logits, ref_feats = reference_forward(x, params)
    assert logits.shape == (BATCH, NUM_CLASSES) and feats.shape == (BATCH, FEAT)
    assert jnp.allclose(logits, ref_logits, atol=1e-4, rtol=1e-4)
    assert jnp.allclose(feats, ref_feats, atol=1e-4, rtol=1e-4)
    print("KERNEL_OK")
</pallas_src>

<mosaic_0001>
module attributes {stable_mosaic.version = 11 : i64} {
  func.func @_classifier_kernel(%arg0: memref<512x32xf32, #tpu.memory_space<vmem>>, %arg1: memref<32x128xf32, #tpu.memory_space<vmem>>, %arg2: memref<1x128xf32, #tpu.memory_space<vmem>>, %arg3: memref<128x128xf32, #tpu.memory_space<vmem>>, %arg4: memref<1x128xf32, #tpu.memory_space<vmem>>, %arg5: memref<2x128xf32, #tpu.memory_space<vmem>>, %arg6: memref<2x128xf32, #tpu.memory_space<vmem>>) attributes {dimension_semantics = [], scalar_prefetch = 0 : i64, scratch_operands = 0 : i64, tpu.core_type = #tpu.core_type<tc>} {
    %c0 = arith.constant 0 : index
    %c0_0 = arith.constant 0 : index
    %0 = vector.load %arg0[%c0, %c0_0] : memref<512x32xf32, #tpu.memory_space<vmem>>, vector<512x32xf32>
    %c0_1 = arith.constant 0 : index
    %c0_2 = arith.constant 0 : index
    %1 = vector.load %arg1[%c0_1, %c0_2] : memref<32x128xf32, #tpu.memory_space<vmem>>, vector<32x128xf32>
    %cst = arith.constant dense<0.000000e+00> : vector<512x128xf32>
    %2 = tpu.matmul %0, %1, %cst {dimension_numbers = #tpu.dot_dimension_numbers<[1], [0], [0], [1], [0, 0, 1, 1], [], []>} : vector<512x32xf32>, vector<32x128xf32>, vector<512x128xf32> -> vector<512x128xf32>
    %c0_3 = arith.constant 0 : index
    %c0_4 = arith.constant 0 : index
    %3 = vector.load %arg2[%c0_3, %c0_4] : memref<1x128xf32, #tpu.memory_space<vmem>>, vector<1x128xf32>
    %4 = vector.broadcast %3 : vector<1x128xf32> to vector<512x128xf32>
    %5 = arith.addf %2, %4 : vector<512x128xf32>
    %cst_5 = arith.constant 0.000000e+00 : f32
    %6 = vector.broadcast %cst_5 : f32 to vector<512x128xf32>
    %7 = arith.maximumf %5, %6 : vector<512x128xf32>
    %8 = vector.extract_strided_slice %7 {offsets = [0, 0], sizes = [256, 128], strides = [1, 1]} : vector<512x128xf32> to vector<256x128xf32>
    %cst_6 = arith.constant dense<0.000000e+00> : vector<128xf32>
    %9 = vector.multi_reduction <add>, %8, %cst_6 [0] : vector<256x128xf32> to vector<128xf32>
    %10 = vector.shape_cast %9 : vector<128xf32> to vector<1x128xf32>
    %11 = vector.extract_strided_slice %7 {offsets = [256, 0], sizes = [256, 128], strides = [1, 1]} : vector<512x128xf32> to vector<256x128xf32>
    %cst_7 = arith.constant dense<0.000000e+00> : vector<128xf32>
    %12 = vector.multi_reduction <add>, %11, %cst_7 [0] : vector<256x128xf32> to vector<128xf32>
    %13 = vector.shape_cast %12 : vector<128xf32> to vector<1x128xf32>
    %14 = tpu.concatenate %10, %13 in 0 : vector<1x128xf32>, vector<1x128xf32> -> vector<2x128xf32>
    %cst_8 = arith.constant 3.906250e-03 : f32
    %15 = vector.broadcast %cst_8 : f32 to vector<2x128xf32>
    %16 = arith.mulf %14, %15 : vector<2x128xf32>
    %c0_9 = arith.constant 0 : index
    %c0_10 = arith.constant 0 : index
    %17 = vector.load %arg3[%c0_9, %c0_10] : memref<128x128xf32, #tpu.memory_space<vmem>>, vector<128x128xf32>
    %cst_11 = arith.constant dense<0.000000e+00> : vector<2x128xf32>
    %18 = tpu.matmul %16, %17, %cst_11 {dimension_numbers = #tpu.dot_dimension_numbers<[1], [0], [0], [1], [0, 0, 1, 1], [], []>} : vector<2x128xf32>, vector<128x128xf32>, vector<2x128xf32> -> vector<2x128xf32>
    %c0_12 = arith.constant 0 : index
    %c0_13 = arith.constant 0 : index
    %19 = vector.load %arg4[%c0_12, %c0_13] : memref<1x128xf32, #tpu.memory_space<vmem>>, vector<1x128xf32>
    %20 = vector.broadcast %19 : vector<1x128xf32> to vector<2x128xf32>
    %21 = arith.addf %18, %20 : vector<2x128xf32>
    %c0_14 = arith.constant 0 : index
    %c0_15 = arith.constant 0 : index
    %22 = vector.load %arg6[%c0_14, %c0_15] : memref<2x128xf32, #tpu.memory_space<vmem>>, vector<2x128xf32>
    tpu.vector_store %arg6[%c0_14, %c0_15], %16 {strides = array<i32>} : memref<2x128xf32, #tpu.memory_space<vmem>>, vector<2x128xf32>,
    %c0_16 = arith.constant 0 : index
    %c0_17 = arith.constant 0 : index
    %23 = vector.load %arg5[%c0_16, %c0_17] : memref<2x128xf32, #tpu.memory_space<vmem>>, vector<2x128xf32>
    tpu.vector_store %arg5[%c0_16, %c0_17], %21 {strides = array<i32>} : memref<2x128xf32, #tpu.memory_space<vmem>>, vector<2x128xf32>,
    return
  }
}

</mosaic_0001>

<llo_original>
// kernel: tpu_custom_call.1
$region0: #{tpu_custom_call.1}
  #allocation0 [shape = 'u32[]', space=smem, size = 0x4, offset = 0x4, fixed_abs, tag = 'smem constant byte address 0x4 - core index']
  #allocation1 [shape = 'u32[144,128]{1,0:T(1,128)}', space=vmem, size = 0x12000, scoped, tag = 'internal scratch']
  %s0 = inlined_call_operand.vmem [shape: f32[512,32], index: 0, kind: input, shape index: {}]
  %s1 = inlined_call_operand.vmem [shape: f32[32,128], index: 1, kind: input, shape index: {}]
  %s2 = inlined_call_operand.vmem [shape: f32[1,128], index: 2, kind: input, shape index: {}]
  %s3 = inlined_call_operand.vmem [shape: f32[128,128], index: 3, kind: input, shape index: {}]
  %s4 = inlined_call_operand.vmem [shape: f32[1,128], index: 4, kind: input, shape index: {}]
  %s5 = inlined_call_operand.hbm [shape: f32[2,128], index: 5, kind: output, shape index: {0}]
  %s6 = inlined_call_operand.hbm [shape: f32[2,128], index: 6, kind: output, shape index: {1}]
  %7 = xla_tuple %s5, %s6
  %s8 = sld [smem:[#allocation0]]
  $region38: #{tpu_custom_call.1} parent=0
    _
  %s10 = ssub.s32 1, %s8
  %s11 = scalar_select 0, %s10, %s8
  $region1: #{tpu_custom_call.1} parent=0
    #allocation2 [shape = 'u8[1024]{0}', space=vmem, size = 0x400, scoped, tag = 'output window, operand 0, single buffered']
    #allocation3 [shape = 's32[1]{0}', space=sflag, size = 0x4, scoped, tag = 'scoped memory for tpu_custom_call.1']
    #allocation4 [shape = 'u8[1024]{0}', space=vmem, size = 0x400, scoped, tag = 'output window, operand 1, single buffered']
    #allocation5 [shape = 's32[1]{0}', space=sflag, size = 0x4, scoped, tag = 'scoped memory for tpu_custom_call.1']
    %12 = vsyncpa [#allocation3], 0
    %13 = vsyncpa [#allocation5], 0
    // Predicated region
    $region2: #{tpu_custom_call.1} parent=1 // pred_check
      _
    $region3: #{tpu_custom_call.1} parent=1 // pred_check_branch
      %15 = sbr.rel (0) target = $region5
    $region4: #{tpu_custom_call.1} parent=1 // pred_region
      _
    $region5: #{tpu_custom_call.1} parent=1 // pred_fallthru
      _
    // Predicated region
    $region6: #{tpu_custom_call.1} parent=1 // pred_check
      _
    $region7: #{tpu_custom_call.1} parent=1 // pred_check_branch
      %17 = sbr.rel (0) target = $region9
    $region8: #{tpu_custom_call.1} parent=1 // pred_region
      _
    $region9: #{tpu_custom_call.1} parent=1 // pred_fallthru
      _
    // Predicated region
    $region10: #{tpu_custom_call.1} parent=1 // pred_check
      _
    $region11: #{tpu_custom_call.1} parent=1 // pred_check_branch
      %19 = sbr.rel (0) target = $region13
    $region12: #{tpu_custom_call.1} parent=1 // pred_region
      _
    $region13: #{tpu_custom_call.1} parent=1 // pred_fallthru
      _
    // Predicated region
    $region14: #{tpu_custom_call.1} parent=1 // pred_check
      _
    $region15: #{tpu_custom_call.1} parent=1 // pred_check_branch
      %21 = sbr.rel (0) target = $region17
    $region16: #{tpu_custom_call.1} parent=1 // pred_region
      _
    $region17: #{tpu_custom_call.1} parent=1 // pred_fallthru
      _
    // Predicated region
    $region18: #{tpu_custom_call.1} parent=1 // pred_check
      _
    $region19: #{tpu_custom_call.1} parent=1 // pred_check_branch
      %23 = sbr.rel (0) target = $region21
    $region20: #{tpu_custom_call.1} parent=1 // pred_region
      _
    $region21: #{tpu_custom_call.1} parent=1 // pred_fallthru
      _
    %v24 = vld [vmem:[%s0] sm:$0xff]
    %v25 = vld [vmem:[%s0 + $0x8] sm:$0xff]
    %v26 = vld [vmem:[%s0 + $0x10] sm:$0xff]
    %v27 = vld [vmem:[%s0 + $0x18] sm:$0xff]
    %v28 = vld [vmem:[%s0 + $0x20] sm:$0xff]
    %v29 = vld [vmem:[%s0 + $0x28] sm:$0xff]
    %v30 = vld [vmem:[%s0 + $0x30] sm:$0xff]
    %v31 = vld [vmem:[%s0 + $0x38] sm:$0xff]
    %v32 = vld [vmem:[%s0 + $0x40] sm:$0xff]
    %v33 = vld [vmem:[%s0 + $0x48] sm:$0xff]
    %v34 = vld [vmem:[%s0 + $0x50] sm:$0xff]
    %v35 = vld [vmem:[%s0 + $0x58] sm:$0xff]
    %v36 = vld [vmem:[%s0 + $0x60] sm:$0xff]
    %v37 = vld [vmem:[%s0 + $0x68] sm:$0xff]
    %v38 = vld [vmem:[%s0 + $0x70] sm:$0xff]
    %v39 = vld [vmem:[%s0 + $0x78] sm:$0xff]
    %v40 = vld [vmem:[%s0 + $0x80] sm:$0xff]
    %v41 = vld [vmem:[%s0 + $0x88] sm:$0xff]
    %v42 = vld [vmem:[%s0 + $0x90] sm:$0xff]
    %v43 = vld [vmem:[%s0 + $0x98] sm:$0xff]
    %v44 = vld [vmem:[%s0 + $0xa0] sm:$0xff]
    %v45 = vld [vmem:[%s0 + $0xa8] sm:$0xff]
    %v46 = vld [vmem:[%s0 + $0xb0] sm:$0xff]
    %v47 = vld [vmem:[%s0 + $0xb8] sm:$0xff]
    %v48 = vld [vmem:[%s0 + $0xc0] sm:$0xff]
    %v49 = vld [vmem:[%s0 + $0xc8] sm:$0xff]
    %v50 = vld [vmem:[%s0 + $0xd0] sm:$0xff]
    %v51 = vld [vmem:[%s0 + $0xd8] sm:$0xff]
    %v52 = vld [vmem:[%s0 + $0xe0] sm:$0xff]
    %v53 = vld [vmem:[%s0 + $0xe8] sm:$0xff]
    %v54 = vld [vmem:[%s0 + $0xf0] sm:$0xff]
    %v55 = vld [vmem:[%s0 + $0xf8] sm:$0xff]
    %v56 = vld [vmem:[%s0 + $0x100] sm:$0xff]
    %v57 = vld [vmem:[%s0 + $0x108] sm:$0xff]
    %v58 = vld [vmem:[%s0 + $0x110] sm:$0xff]
    %v59 = vld [vmem:[%s0 + $0x118] sm:$0xff]
    %v60 = vld [vmem:[%s0 + $0x120] sm:$0xff]
    %v61 = vld [vmem:[%s0 + $0x128] sm:$0xff]
    %v62 = vld [vmem:[%s0 + $0x130] sm:$0xff]
    %v63 = vld [vmem:[%s0 + $0x138] sm:$0xff]
    %v64 = vld [vmem:[%s0 + $0x140] sm:$0xff]
    %v65 = vld [vmem:[%s0 + $0x148] sm:$0xff]
    %v66 = vld [vmem:[%s0 + $0x150] sm:$0xff]
    %v67 = vld [vmem:[%s0 + $0x158] sm:$0xff]
    %v68 = vld [vmem:[%s0 + $0x160] sm:$0xff]
    %v69 = vld [vmem:[%s0 + $0x168] sm:$0xff]
    %v70 = vld [vmem:[%s0 + $0x170] sm:$0xff]
    %v71 = vld [vmem:[%s0 + $0x178] sm:$0xff]
    %v72 = vld [vmem:[%s0 + $0x180] sm:$0xff]
    %v73 = vld [vmem:[%s0 + $0x188] sm:$0xff]
    %v74 = vld [vmem:[%s0 + $0x190] sm:$0xff]
    %v75 = vld [vmem:[%s0 + $0x198] sm:$0xff]
    %v76 = vld [vmem:[%s0 + $0x1a0] sm:$0xff]
    %v77 = vld [vmem:[%s0 + $0x1a8] sm:$0xff]
    %v78 = vld [vmem:[%s0 + $0x1b0] sm:$0xff]
    %v79 = vld [vmem:[%s0 + $0x1b8] sm:$0xff]
    %v80 = vld [vmem:[%s0 + $0x1c0] sm:$0xff]
    %v81 = vld [vmem:[%s0 + $0x1c8] sm:$0xff]
    %v82 = vld [vmem:[%s0 + $0x1d0] sm:$0xff]
    %v83 = vld [vmem:[%s0 + $0x1d8] sm:$0xff]
    %v84 = vld [vmem:[%s0 + $0x1e0] sm:$0xff]
    %v85 = vld [vmem:[%s0 + $0x1e8] sm:$0xff]
    %v86 = vld [vmem:[%s0 + $0x1f0] sm:$0xff]
    %v87 = vld [vmem:[%s0 + $0x1f8] sm:$0xff]
    %v88 = vld [vmem:[%s1] sm:$0xff]
    %v89 = vld [vmem:[%s1 + $0x8] sm:$0xff]
    %v90 = vld [vmem:[%s1 + $0x10] sm:$0xff]
    %v91 = vld [vmem:[%s1 + $0x18] sm:$0xff]
    %v92 = vld [vmem:[%s2] sm:$0x1]
    %v94 = vlaneseq
    %v95 = vshrl.u32 %v94, 7
    %v96 = vsub.s32 0, %v95
    %v97 = vrot.slane %v92, %v96
    %vm99 = vcmask 261120
    %v101 = vsel %vm99, %v24, 0
    %v104 = vsel %vm99, %v25, 0
    %v107 = vsel %vm99, %v26, 0
    %v110 = vsel %vm99, %v27, 0
    %v113 = vsel %vm99, %v28, 0
    %v116 = vsel %vm99, %v29, 0
    %v119 = vsel %vm99, %v30, 0
    %v122 = vsel %vm99, %v31, 0
    %v125 = vsel %vm99, %v32, 0
    %v128 = vsel %vm99, %v33, 0
    %v131 = vsel %vm99, %v34, 0
    %v134 = vsel %vm99, %v35, 0
    %v137 = vsel %vm99, %v36, 0
    %v140 = vsel %vm99, %v37, 0
    %v143 = vsel %vm99, %v38, 0
    %v146 = vsel %vm99, %v39, 0
    %v149 = vsel %vm99, %v40, 0
    %v152 = vsel %vm99, %v41, 0
    %v155 = vsel %vm99, %v42, 0
    %v158 = vsel %vm99, %v43, 0
    %v161 = vsel %vm99, %v44, 0
    %v164 = vsel %vm99, %v45, 0
    %v167 = vsel %vm99, %v46, 0
    %v170 = vsel %vm99, %v47, 0
    %v173 = vsel %vm99, %v48, 0
    %v176 = vsel %vm99, %v49, 0
    %v179 = vsel %vm99, %v50, 0
    %v182 = vsel %vm99, %v51, 0
    %v185 = vsel %vm99, %v52, 0
    %v188 = vsel %vm99, %v53, 0
    %v191 = vsel %vm99, %v54, 0
    %v194 = vsel %vm99, %v55, 0
    %v197 = vsel %vm99, %v56, 0
    %v200 = vsel %vm99, %v57, 0
    %v203 = vsel %vm99, %v58, 0
    %v206 = vsel %vm99, %v59, 0
    %v209 = vsel %vm99, %v60, 0
    %v212 = vsel %vm99, %v61, 0
    %v215 = vsel %vm99, %v62, 0
    %v218 = vsel %vm99, %v63, 0
    %v221 = vsel %vm99, %v64, 0
    %v224 = vsel %vm99, %v65, 0
    %v227 = vsel %vm99, %v66, 0
    %v230 = vsel %vm99, %v67, 0
    %v233 = vsel %vm99, %v68, 0
    %v236 = vsel %vm99, %v69, 0
    %v239 = vsel %vm99, %v70, 0
    %v242 = vsel %vm99, %v71, 0
    %v245 = vsel %vm99, %v72, 0
    %v248 = vsel %vm99, %v73, 0
    %v251 = vsel %vm99, %v74, 0
    %v254 = vsel %vm99, %v75, 0
    %v257 = vsel %vm99, %v76, 0
    %v260 = vsel %vm99, %v77, 0
    %v263 = vsel %vm99, %v78, 0
    %v266 = vsel %vm99, %v79, 0
    %v269 = vsel %vm99, %v80, 0
    %v272 = vsel %vm99, %v81, 0
    %v275 = vsel %vm99, %v82, 0
    %v278 = vsel %vm99, %v83, 0
    %v281 = vsel %vm99, %v84, 0
    %v284 = vsel %vm99, %v85, 0
    %v287 = vsel %vm99, %v86, 0
    %v290 = vsel %vm99, %v87, 0
    %292 = vmatprep.subr.mxu0 0.0
    %293 = vmatpush1.msra.mxu0 %v88
    %294 = vmatprep.subr.mxu0 0.0
    %295 = vmatpush1.msra.mxu0 %v89
    %296 = vmatprep.subr.mxu0 0.0
    %297 = vmatpush1.msra.mxu0 %v90
    %298 = vmatprep.subr.mxu0 0.0
    %299 = vmatpush1.msra.mxu0 %v91
    %300 = vmatprep.subr.mxu0 0.0
    %301 = vmatpush1.msra.mxu0 0.0
    %302 = vmatprep.subr.mxu0 0.0
    %303 = vmatpush1.msra.mxu0 0.0
    %304 = vmatprep.subr.mxu0 0.0
    %305 = vmatpush1.msra.mxu0 0.0
    %306 = vmatprep.subr.mxu0 0.0
    %307 = vmatpush1.msra.mxu0 0.0
    %308 = vmatprep.subr.mxu0 0.0
    %309 = vmatpush1.msra.mxu0 0.0
    %310 = vmatprep.subr.mxu0 0.0
    %311 = vmatpush1.msra.mxu0 0.0
    %312 = vmatprep.subr.mxu0 0.0
    %313 = vmatpush1.msra.mxu0 0.0
    %314 = vmatprep.subr.mxu0 0.0
    %315 = vmatpush1.msra.mxu0 0.0
    %316 = vmatprep.subr.mxu0 0.0
    %317 = vmatpush1.msra.mxu0 0.0
    %318 = vmatprep.subr.mxu0 0.0
    %319 = vmatpush1.msra.mxu0 0.0
    %320 = vmatprep.subr.mxu0 0.0
    %321 = vmatpush1.msra.mxu0 0.0
    %322 = vmatprep.subr.mxu0 0.0
    %323 = vmatpush1.msra.mxu0 0.0
    %324 = vmatprep.subr.mxu0 0.0
    %325 = vmatpush1.msra.mxu0 0.0
    %326 = vmatprep.subr.mxu0 0.0
    %327 = vmatpush1.msra.mxu0 0.0
    %328 = vmatprep.subr.mxu0 0.0
    %329 = vmatpush1.msra.mxu0 0.0
    %330 = vmatprep.subr.mxu0 0.0
    %331 = vmatpush1.msra.mxu0 0.0
    %332 = vmatprep.subr.mxu0 0.0
    %333 = vmatpush1.msra.mxu0 0.0
    %334 = vmatprep.subr.mxu0 0.0
    %335 = vmatpush1.msra.mxu0 0.0
    %336 = vmatprep.subr.mxu0 0.0
    %337 = vmatpush1.msra.mxu0 0.0
    %338 = vmatprep.subr.mxu0 0.0
    %339 = vmatpush1.msra.mxu0 0.0
    %340 = vmatprep.subr.mxu0 0.0
    %341 = vmatpush1.msra.mxu0 0.0
    %342 = vmatprep.subr.mxu0 0.0
    %343 = vmatpush1.msra.mxu0 0.0
    %344 = vmatprep.subr.mxu0 0.0
    %345 = vmatpush1.msra.mxu0 0.0
    %346 = vmatprep.subr.mxu0 0.0
    %347 = vmatpush1.msra.mxu0 0.0
    %348 = vmatprep.subr.mxu0 0.0
    %349 = vmatpush1.msra.mxu0 0.0
    %350 = vmatprep.subr.mxu0 0.0
    %351 = vmatpush1.msra.mxu0 0.0
    %352 = vmatprep.subr.mxu0 0.0
    %353 = vmatpush1.msra.mxu0 0.0
    %354 = vmatprep.subr.mxu0 0.0
    %355 = vmatpush1.msra.mxu0 0.0
    %356 = vmatprep.mubr.f32.mxu0 0.0
    %357 = vmatmul.mubr.f32.gmra.mrb[0].mxu0 %v101
    %v358 = vpop.f32.mrb[0].mxu0
    %v359 = vadd.f32 %v97, %v358
    %v360 = vpop.f32.mrb[0].mxu0
    %361 = vmatprep.mubr.f32.mxu0 0.0
    %362 = vmatmul.mubr.f32.gmra.mrb[0].mxu0 %v104
    %v363 = vpop.f32.mrb[0].mxu0
    %v364 = vadd.f32 %v97, %v363
    %v365 = vpop.f32.mrb[0].mxu0
    %366 = vmatprep.mubr.f32.mxu0 0.0
    %367 = vmatmul.mubr.f32.gmra.mrb[0].mxu0 %v107
    %v368 = vpop.f32.mrb[0].mxu0
    %v369 = vadd.f32 %v97, %v368
    %v370 = vpop.f32.mrb[0].mxu0
    %371 = vmatprep.mubr.f32.mxu0 0.0
    %372 = vmatmul.mubr.f32.gmra.mrb[0].mxu0 %v110
    %v373 = vpop.f32.mrb[0].mxu0
    %v374 = vadd.f32 %v97, %v373
    %v375 = vpop.f32.mrb[0].mxu0
    %376 = vmatprep.mubr.f32.mxu0 0.0
    %377 = vmatmul.mubr.f32.gmra.mrb[0].mxu0 %v113
    %v378 = vpop.f32.mrb[0].mxu0
    %v379 = vadd.f32 %v97, %v378
    %v380 = vpop.f32.mrb[0].mxu0
    %381 = vmatprep.mubr.f32.mxu0 0.0
    %382 = vmatmul.mubr.f32.gmra.mrb[0].mxu0 %v116
    %v383 = vpop.f32.mrb[0].mxu0
    %v384 = vadd.f32 %v97, %v383
    %v385 = vpop.f32.mrb[0].mxu0
    %386 = vmatprep.mubr.f32.mxu0 0.0
    %387 = vmatmul.mubr.f32.gmra.mrb[0].mxu0 %v119
    %v388 = vpop.f32.mrb[0].mxu0
    %v389 = vadd.f32 %v97, %v388
    %v390 = vpop.f32.mrb[0].mxu0
    %391 = vmatprep.mubr.f32.mxu0 0.0
    %392 = vmatmul.mubr.f32.gmra.mrb[0].mxu0 %v122
    %v393 = vpop.f32.mrb[0].mxu0
    %v394 = vadd.f32 %v97, %v393
    %v395 = vpop.f32.mrb[0].mxu0
    %396 = vmatprep.mubr.f32.mxu0 0.0
    %397 = vmatmul.mubr.f32.gmra.mrb[0].mxu0 %v125
    %v398 = vpop.f32.mrb[0].mxu0
    %v399 = vadd.f32 %v97, %v398
    %v400 = vpop.f32.mrb[0].mxu0
    %401 = vmatprep.mubr.f32.mxu0 0.0
    %402 = vmatmul.mubr.f32.gmra.mrb[0].mxu0 %v128
    %v403 = vpop.f32.mrb[0].mxu0
    %v404 = vadd.f32 %v97, %v403
    %v405 = vpop.f32.mrb[0].mxu0
    %406 = vmatprep.mubr.f32.mxu0 0.0
    %407 = vmatmul.mubr.f32.gmra.mrb[0].mxu0 %v131
    %v408 = vpop.f32.mrb[0].mxu0
    %v409 = vadd.f32 %v97, %v408
    %v410 = vpop.f32.mrb[0].mxu0
    %411 = vmatprep.mubr.f32.mxu0 0.0
    %412 = vmatmul.mubr.f32.gmra.mrb[0].mxu0 %v134
    %v413 = vpop.f32.mrb[0].mxu0
    %v414 = vadd.f32 %v97, %v413
    %v415 = vpop.f32.mrb[0].mxu0
    %416 = vmatprep.mubr.f32.mxu0 0.0
    %417 = vmatmul.mubr.f32.gmra.mrb[0].mxu0 %v137
    %v418 = vpop.f32.mrb[0].mxu0
    %v419 = vadd.f32 %v97, %v418
    %v420 = vpop.f32.mrb[0].mxu0
    %421 = vmatprep.mubr.f32.mxu0 0.0
    %422 = vmatmul.mubr.f32.gmra.mrb[0].mxu0 %v140
    %v423 = vpop.f32.mrb[0].mxu0
    %v424 = vadd.f32 %v97, %v423
    %v425 = vpop.f32.mrb[0].mxu0
    %426 = vmatprep.mubr.f32.mxu0 0.0
    %427 = vmatmul.mubr.f32.gmra.mrb[0].mxu0 %v143
    %v428 = vpop.f32.mrb[0].mxu0
    %v429 = vadd.f32 %v97, %v428
    %v430 = vpop.f32.mrb[0].mxu0
    %431 = vmatprep.mubr.f32.mxu0 0.0
    %432 = vmatmul.mubr.f32.gmra.mrb[0].mxu0 %v146
    %v433 = vpop.f32.mrb[0].mxu0
    %v434 = vadd.f32 %v97, %v433
    %v435 = vpop.f32.mrb[0].mxu0
    %436 = vmatprep.mubr.f32.mxu0 0.0
    %437 = vmatmul.mubr.f32.gmra.mrb[0].mxu0 %v149
    %v438 = vpop.f32.mrb[0].mxu0
    %v439 = vadd.f32 %v97, %v438
    %v440 = vpop.f32.mrb[0].mxu0
    %441 = vmatprep.mubr.f32.mxu0 0.0
    %442 = vmatmul.mubr.f32.gmra.mrb[0].mxu0 %v152
    %v443 = vpop.f32.mrb[0].mxu0
    %v444 = vadd.f32 %v97, %v443
    %v445 = vpop.f32.mrb[0].mxu0
    %446 = vmatprep.mubr.f32.mxu0 0.0
    %447 = vmatmul.mubr.f32.gmra.mrb[0].mxu0 %v155
    %v448 = vpop.f32.mrb[0].mxu0
    %v449 = vadd.f32 %v97, %v448
    %v450 = vpop.f32.mrb[0].mxu0
    %451 = vmatprep.mubr.f32.mxu0 0.0
    %452 = vmatmul.mubr.f32.gmra.mrb[0].mxu0 %v158
    %v453 = vpop.f32.mrb[0].mxu0
    %v454 = vadd.f32 %v97, %v453
    %v455 = vpop.f32.mrb[0].mxu0
    %456 = vmatprep.mubr.f32.mxu0 0.0
    %457 = vmatmul.mubr.f32.gmra.mrb[0].mxu0 %v161
    %v458 = vpop.f32.mrb[0].mxu0
    %v459 = vadd.f32 %v97, %v458
    %v460 = vpop.f32.mrb[0].mxu0
    %461 = vmatprep.mubr.f32.mxu0 0.0
    %462 = vmatmul.mubr.f32.gmra.mrb[0].mxu0 %v164
    %v463 = vpop.f32.mrb[0].mxu0
    %v464 = vadd.f32 %v97, %v463
    %v465 = vpop.f32.mrb[0].mxu0
    %466 = vmatprep.mubr.f32.mxu0 0.0
    %467 = vmatmul.mubr.f32.gmra.mrb[0].mxu0 %v167
    %v468 = vpop.f32.mrb[0].mxu0
    %v469 = vadd.f32 %v97, %v468
    %v470 = vpop.f32.mrb[0].mxu0
    %471 = vmatprep.mubr.f32.mxu0 0.0
    %472 = vmatmul.mubr.f32.gmra.mrb[0].mxu0 %v170
    %v473 = vpop.f32.mrb[0].mxu0
    %v474 = vadd.f32 %v97, %v473
    %v475 = vpop.f32.mrb[0].mxu0
    %476 = vmatprep.mubr.f32.mxu0 0.0
    %477 = vmatmul.mubr.f32.gmra.mrb[0].mxu0 %v173
    %v478 = vpop.f32.mrb[0].mxu0
    %v479 = vadd.f32 %v97, %v478
    %v480 = vpop.f32.mrb[0].mxu0
    %481 = vmatprep.mubr.f32.mxu0 0.0
    %482 = vmatmul.mubr.f32.gmra.mrb[0].mxu0 %v176
    %v483 = vpop.f32.mrb[0].mxu0
    %v484 = vadd.f32 %v97, %v483
    %v485 = vpop.f32.mrb[0].mxu0
    %486 = vmatprep.mubr.f32.mxu0 0.0
    %487 = vmatmul.mubr.f32.gmra.mrb[0].mxu0 %v179
    %v488 = vpop.f32.mrb[0].mxu0
    %v489 = vadd.f32 %v97, %v488
    %v490 = vpop.f32.mrb[0].mxu0
    %491 = vmatprep.mubr.f32.mxu0 0.0
    %492 = vmatmul.mubr.f32.gmra.mrb[0].mxu0 %v182
    %v493 = vpop.f32.mrb[0].mxu0
    %v494 = vadd.f32 %v97, %v493
    %v495 = vpop.f32.mrb[0].mxu0
    %496 = vmatprep.mubr.f32.mxu0 0.0
    %497 = vmatmul.mubr.f32.gmra.mrb[0].mxu0 %v185
    %v498 = vpop.f32.mrb[0].mxu0
    %v499 = vadd.f32 %v97, %v498
    %v500 = vpop.f32.mrb[0].mxu0
    %501 = vmatprep.mubr.f32.mxu0 0.0
    %502 = vmatmul.mubr.f32.gmra.mrb[0].mxu0 %v188
    %v503 = vpop.f32.mrb[0].mxu0
    %v504 = vadd.f32 %v97, %v503
    %v505 = vpop.f32.mrb[0].mxu0
    %506 = vmatprep.mubr.f32.mxu0 0.0
    %507 = vmatmul.mubr.f32.gmra.mrb[0].mxu0 %v191
    %v508 = vpop.f32.mrb[0].mxu0
    %v509 = vadd.f32 %v97, %v508
    %v510 = vpop.f32.mrb[0].mxu0
    %511 = vmatprep.mubr.f32.mxu0 0.0
    %512 = vmatmul.mubr.f32.gmra.mrb[0].mxu0 %v194
    %v513 = vpop.f32.mrb[0].mxu0
    %v514 = vadd.f32 %v97, %v513
    %v515 = vpop.f32.mrb[0].mxu0
    %516 = vmatprep.mubr.f32.mxu0 0.0
    %517 = vmatmul.mubr.f32.gmra.mrb[0].mxu0 %v197
    %v518 = vpop.f32.mrb[0].mxu0
    %v519 = vadd.f32 %v97, %v518
    %v520 = vpop.f32.mrb[0].mxu0
    %521 = vmatprep.mubr.f32.mxu0 0.0
    %522 = vmatmul.mubr.f32.gmra.mrb[0].mxu0 %v200
    %v523 = vpop.f32.mrb[0].mxu0
    %v524 = vadd.f32 %v97, %v523
    %v525 = vpop.f32.mrb[0].mxu0
    %526 = vmatprep.mubr.f32.mxu0 0.0
    %527 = vmatmul.mubr.f32.gmra.mrb[0].mxu0 %v203
    %v528 = vpop.f32.mrb[0].mxu0
    %v529 = vadd.f32 %v97, %v528
    %v530 = vpop.f32.mrb[0].mxu0
    %531 = vmatprep.mubr.f32.mxu0 0.0
    %532 = vmatmul.mubr.f32.gmra.mrb[0].mxu0 %v206
    %v533 = vpop.f32.mrb[0].mxu0
    %v534 = vadd.f32 %v97, %v533
    %v535 = vpop.f32.mrb[0].mxu0
    %536 = vmatprep.mubr.f32.mxu0 0.0
    %537 = vmatmul.mubr.f32.gmra.mrb[0].mxu0 %v209
    %v538 = vpop.f32.mrb[0].mxu0
    %v539 = vadd.f32 %v97, %v538
    %v540 = vpop.f32.mrb[0].mxu0
    %541 = vmatprep.mubr.f32.mxu0 0.0
    %542 = vmatmul.mubr.f32.gmra.mrb[0].mxu0 %v212
    %v543 = vpop.f32.mrb[0].mxu0
    %v544 = vadd.f32 %v97, %v543
    %v545 = vpop.f32.mrb[0].mxu0
    %546 = vmatprep.mubr.f32.mxu0 0.0
    %547 = vmatmul.mubr.f32.gmra.mrb[0].mxu0 %v215
    %v548 = vpop.f32.mrb[0].mxu0
    %v549 = vadd.f32 %v97, %v548
    %v550 = vpop.f32.mrb[0].mxu0
    %551 = vmatprep.mubr.f32.mxu0 0.0
    %552 = vmatmul.mubr.f32.gmra.mrb[0].mxu0 %v218
    %v553 = vpop.f32.mrb[0].mxu0
    %v554 = vadd.f32 %v97, %v553
    %v555 = vpop.f32.mrb[0].mxu0
    %556 = vmatprep.mubr.f32.mxu0 0.0
    %557 = vmatmul.mubr.f32.gmra.mrb[0].mxu0 %v221
    %v558 = vpop.f32.mrb[0].mxu0
    %v559 = vadd.f32 %v97, %v558
    %v560 = vpop.f32.mrb[0].mxu0
    %561 = vmatprep.mubr.f32.mxu0 0.0
    %562 = vmatmul.mubr.f32.gmra.mrb[0].mxu0 %v224
    %v563 = vpop.f32.mrb[0].mxu0
    %v564 = vadd.f32 %v97, %v563
    %v565 = vpop.f32.mrb[0].mxu0
    %566 = vmatprep.mubr.f32.mxu0 0.0
    %567 = vmatmul.mubr.f32.gmra.mrb[0].mxu0 %v227
    %v568 = vpop.f32.mrb[0].mxu0
    %v569 = vadd.f32 %v97, %v568
    %v570 = vpop.f32.mrb[0].mxu0
    %571 = vmatprep.mubr.f32.mxu0 0.0
    %572 = vmatmul.mubr.f32.gmra.mrb[0].mxu0 %v230
    %v573 = vpop.f32.mrb[0].mxu0
    %v574 = vadd.f32 %v97, %v573
    %v575 = vpop.f32.mrb[0].mxu0
    %576 = vmatprep.mubr.f32.mxu0 0.0
    %577 = vmatmul.mubr.f32.gmra.mrb[0].mxu0 %v233
    %v578 = vpop.f32.mrb[0].mxu0
    %v579 = vadd.f32 %v97, %v578
    %v580 = vpop.f32.mrb[0].mxu0
    %581 = vmatprep.mubr.f32.mxu0 0.0
    %582 = vmatmul.mubr.f32.gmra.mrb[0].mxu0 %v236
    %v583 = vpop.f32.mrb[0].mxu0
    %v584 = vadd.f32 %v97, %v583
    %v585 = vpop.f32.mrb[0].mxu0
    %586 = vmatprep.mubr.f32.mxu0 0.0
    %587 = vmatmul.mubr.f32.gmra.mrb[0].mxu0 %v239
    %v588 = vpop.f32.mrb[0].mxu0
    %v589 = vadd.f32 %v97, %v588
    %v590 = vpop.f32.mrb[0].mxu0
    %591 = vmatprep.mubr.f32.mxu0 0.0
    %592 = vmatmul.mubr.f32.gmra.mrb[0].mxu0 %v242
    %v593 = vpop.f32.mrb[0].mxu0
    %v594 = vadd.f32 %v97, %v593
    %v595 = vpop.f32.mrb[0].mxu0
    %596 = vmatprep.mubr.f32.mxu0 0.0
    %597 = vmatmul.mubr.f32.gmra.mrb[0].mxu0 %v245
    %v598 = vpop.f32.mrb[0].mxu0
    %v599 = vadd.f32 %v97, %v598
    %v600 = vpop.f32.mrb[0].mxu0
    %601 = vmatprep.mubr.f32.mxu0 0.0
    %602 = vmatmul.mubr.f32.gmra.mrb[0].mxu0 %v248
    %v603 = vpop.f32.mrb[0].mxu0
    %v604 = vadd.f32 %v97, %v603
    %v605 = vpop.f32.mrb[0].mxu0
    %606 = vmatprep.mubr.f32.mxu0 0.0
    %607 = vmatmul.mubr.f32.gmra.mrb[0].mxu0 %v251
    %v608 = vpop.f32.mrb[0].mxu0
    %v609 = vadd.f32 %v97, %v608
    %v610 = vpop.f32.mrb[0].mxu0
    %611 = vmatprep.mubr.f32.mxu0 0.0
    %612 = vmatmul.mubr.f32.gmra.mrb[0].mxu0 %v254
    %v613 = vpop.f32.mrb[0].mxu0
    %v614 = vadd.f32 %v97, %v613
    %v615 = vpop.f32.mrb[0].mxu0
    %616 = vmatprep.mubr.f32.mxu0 0.0
    %617 = vmatmul.mubr.f32.gmra.mrb[0].mxu0 %v257
    %v618 = vpop.f32.mrb[0].mxu0
    %v619 = vadd.f32 %v97, %v618
    %v620 = vpop.f32.mrb[0].mxu0
    %621 = vmatprep.mubr.f32.mxu0 0.0
    %622 = vmatmul.mubr.f32.gmra.mrb[0].mxu0 %v260
    %v623 = vpop.f32.mrb[0].mxu0
    %v624 = vadd.f32 %v97, %v623
    %v625 = vpop.f32.mrb[0].mxu0
    %626 = vmatprep.mubr.f32.mxu0 0.0
    %627 = vmatmul.mubr.f32.gmra.mrb[0].mxu0 %v263
    %v628 = vpop.f32.mrb[0].mxu0
    %v629 = vadd.f32 %v97, %v628
    %v630 = vpop.f32.mrb[0].mxu0
    %631 = vmatprep.mubr.f32.mxu0 0.0
    %632 = vmatmul.mubr.f32.gmra.mrb[0].mxu0 %v266
    %v633 = vpop.f32.mrb[0].mxu0
    %v634 = vadd.f32 %v97, %v633
    %v635 = vpop.f32.mrb[0].mxu0
    %636 = vmatprep.mubr.f32.mxu0 0.0
    %637 = vmatmul.mubr.f32.gmra.mrb[0].mxu0 %v269
    %v638 = vpop.f32.mrb[0].mxu0
    %v639 = vadd.f32 %v97, %v638
    %v640 = vpop.f32.mrb[0].mxu0
    %641 = vmatprep.mubr.f32.mxu0 0.0
    %642 = vmatmul.mubr.f32.gmra.mrb[0].mxu0 %v272
    %v643 = vpop.f32.mrb[0].mxu0
    %v644 = vadd.f32 %v97, %v643
    %v645 = vpop.f32.mrb[0].mxu0
    %646 = vmatprep.mubr.f32.mxu0 0.0
    %647 = vmatmul.mubr.f32.gmra.mrb[0].mxu0 %v275
    %v648 = vpop.f32.mrb[0].mxu0
    %v649 = vadd.f32 %v97, %v648
    %v650 = vpop.f32.mrb[0].mxu0
    %651 = vmatprep.mubr.f32.mxu0 0.0
    %652 = vmatmul.mubr.f32.gmra.mrb[0].mxu0 %v278
    %v653 = vpop.f32.mrb[0].mxu0
    %v654 = vadd.f32 %v97, %v653
    %v655 = vpop.f32.mrb[0].mxu0
    %656 = vmatprep.mubr.f32.mxu0 0.0
    %657 = vmatmul.mubr.f32.gmra.mrb[0].mxu0 %v281
    %v658 = vpop.f32.mrb[0].mxu0
    %v659 = vadd.f32 %v97, %v658
    %v660 = vpop.f32.mrb[0].mxu0
    %661 = vmatprep.mubr.f32.mxu0 0.0
    %662 = vmatmul.mubr.f32.gmra.mrb[0].mxu0 %v284
    %v663 = vpop.f32.mrb[0].mxu0
    %v664 = vadd.f32 %v97, %v663
    %v665 = vpop.f32.mrb[0].mxu0
    %666 = vmatprep.mubr.f32.mxu0 0.0
    %667 = vmatmul.mubr.f32.gmra.mrb[0].mxu0 %v287
    %v668 = vpop.f32.mrb[0].mxu0
    %v669 = vadd.f32 %v97, %v668
    %v670 = vpop.f32.mrb[0].mxu0
    %671 = vmatprep.mubr.f32.mxu0 0.0
    %672 = vmatmul.mubr.f32.gmra.mrb[0].mxu0 %v290
    %v673 = vpop.f32.mrb[0].mxu0
    %v674 = vadd.f32 %v97, %v673
    %v675 = vpop.f32.mrb[0].mxu0
    %676 = vdwg.mxu0
    %v677 = vmax.f32 %v359, 0.0
    %v678 = vmax.f32 %v364, 0.0
    %v679 = vmax.f32 %v369, 0.0
    %v680 = vmax.f32 %v374, 0.0
    %v681 = vmax.f32 %v379, 0.0
    %v682 = vmax.f32 %v384, 0.0
    %v683 = vmax.f32 %v389, 0.0
    %v684 = vmax.f32 %v394, 0.0
    %v685 = vmax.f32 %v399, 0.0
    %v686 = vmax.f32 %v404, 0.0
    %v687 = vmax.f32 %v409, 0.0
    %v688 = vmax.f32 %v414, 0.0
    %v689 = vmax.f32 %v419, 0.0
    %v690 = vmax.f32 %v424, 0.0
    %v691 = vmax.f32 %v429, 0.0
    %v692 = vmax.f32 %v434, 0.0
    %v693 = vmax.f32 %v439, 0.0
    %v694 = vmax.f32 %v444, 0.0
    %v695 = vmax.f32 %v449, 0.0
    %v696 = vmax.f32 %v454, 0.0
    %v697 = vmax.f32 %v459, 0.0
    %v698 = vmax.f32 %v464, 0.0
    %v699 = vmax.f32 %v469, 0.0
    %v700 = vmax.f32 %v474, 0.0
    %v701 = vmax.f32 %v479, 0.0
    %v702 = vmax.f32 %v484, 0.0
    %v703 = vmax.f32 %v489, 0.0
    %v704 = vmax.f32 %v494, 0.0
    %v705 = vmax.f32 %v499, 0.0
    %v706 = vmax.f32 %v504, 0.0
    %v707 = vmax.f32 %v509, 0.0
    %v708 = vmax.f32 %v514, 0.0
    %v709 = vmax.f32 %v519, 0.0
    %v710 = vmax.f32 %v524, 0.0
    %v711 = vmax.f32 %v529, 0.0
    %v712 = vmax.f32 %v534, 0.0
    %v713 = vmax.f32 %v539, 0.0
    %v714 = vmax.f32 %v544, 0.0
    %v715 = vmax.f32 %v549, 0.0
    %v716 = vmax.f32 %v554, 0.0
    %v717 = vmax.f32 %v559, 0.0
    %v718 = vmax.f32 %v564, 0.0
    %v719 = vmax.f32 %v569, 0.0
    %v720 = vmax.f32 %v574, 0.0
    %v721 = vmax.f32 %v579, 0.0
    %v722 = vmax.f32 %v584, 0.0
    %v723 = vmax.f32 %v589, 0.0
    %v724 = vmax.f32 %v594, 0.0
    %v725 = vmax.f32 %v599, 0.0
    %v726 = vmax.f32 %v604, 0.0
    %v727 = vmax.f32 %v609, 0.0
    %v728 = vmax.f32 %v614, 0.0
    %v729 = vmax.f32 %v619, 0.0
    %v730 = vmax.f32 %v624, 0.0
    %v731 = vmax.f32 %v629, 0.0
    %v732 = vmax.f32 %v634, 0.0
    %v733 = vmax.f32 %v639, 0.0
    %v734 = vmax.f32 %v644, 0.0
    %v735 = vmax.f32 %v649, 0.0
    %v736 = vmax.f32 %v654, 0.0
    %v737 = vmax.f32 %v659, 0.0
    %v738 = vmax.f32 %v664, 0.0
    %v739 = vmax.f32 %v669, 0.0
    %v740 = vmax.f32 %v674, 0.0
    %v741 = vadd.f32 %v677, %v678
    %v742 = vadd.f32 %v741, %v679
    %v743 = vadd.f32 %v742, %v680
    %v744 = vadd.f32 %v743, %v681
    %v745 = vadd.f32 %v744, %v682
    %v746 = vadd.f32 %v745, %v683
    %v747 = vadd.f32 %v746, %v684
    %v748 = vadd.f32 %v747, %v685
    %v749 = vadd.f32 %v748, %v686
    %v750 = vadd.f32 %v749, %v687
    %v751 = vadd.f32 %v750, %v688
    %v752 = vadd.f32 %v751, %v689
    %v753 = vadd.f32 %v752, %v690
    %v754 = vadd.f32 %v753, %v691
    %v755 = vadd.f32 %v754, %v692
    %v756 = vadd.f32 %v755, %v693
    %v757 = vadd.f32 %v756, %v694
    %v758 = vadd.f32 %v757, %v695
    %v759 = vadd.f32 %v758, %v696
    %v760 = vadd.f32 %v759, %v697
    %v761 = vadd.f32 %v760, %v698
    %v762 = vadd.f32 %v761, %v699
    %v763 = vadd.f32 %v762, %v700
    %v764 = vadd.f32 %v763, %v701
    %v765 = vadd.f32 %v764, %v702
    %v766 = vadd.f32 %v765, %v703
    %v767 = vadd.f32 %v766, %v704
    %v768 = vadd.f32 %v767, %v705
    %v769 = vadd.f32 %v768, %v706
    %v770 = vadd.f32 %v769, %v707
    %v771 = vadd.f32 %v770, %v708
    %v772 = vrot.slane %v771, 4
    %v773 = vadd.f32 %v771, %v772
    %v774 = vrot.slane %v773, 2
    %v775 = vadd.f32 %v773, %v774
    %v776 = vrot.slane %v775, 1
    %v777 = vadd.f32 %v775, %v776
    %v778 = vadd.f32 %v709, %v710
    %v779 = vadd.f32 %v778, %v711
    %v780 = vadd.f32 %v779, %v712
    %v781 = vadd.f32 %v780, %v713
    %v782 = vadd.f32 %v781, %v714
    %v783 = vadd.f32 %v782, %v715
    %v784 = vadd.f32 %v783, %v716
    %v785 = vadd.f32 %v784, %v717
    %v786 = vadd.f32 %v785, %v718
    %v787 = vadd.f32 %v786, %v719
    %v788 = vadd.f32 %v787, %v720
    %v789 = vadd.f32 %v788, %v721
    %v790 = vadd.f32 %v789, %v722
    %v791 = vadd.f32 %v790, %v723
    %v792 = vadd.f32 %v791, %v724
    %v793 = vadd.f32 %v792, %v725
    %v794 = vadd.f32 %v793, %v726
    %v795 = vadd.f32 %v794, %v727
    %v796 = vadd.f32 %v795, %v728
    %v797 = vadd.f32 %v796, %v729
    %v798 = vadd.f32 %v797, %v730
    %v799 = vadd.f32 %v798, %v731
    %v800 = vadd.f32 %v799, %v732
    %v801 = vadd.f32 %v800, %v733
    %v802 = vadd.f32 %v801, %v734
    %v803 = vadd.f32 %v802, %v735
    %v804 = vadd.f32 %v803, %v736
    %v805 = vadd.f32 %v804, %v737
    %v806 = vadd.f32 %v805, %v738
    %v807 = vadd.f32 %v806, %v739
    %v808 = vadd.f32 %v807, %v740
    %v809 = vrot.slane %v808, 4
    %v810 = vadd.f32 %v808, %v809
    %v811 = vrot.slane %v810, 2
    %v812 = vadd.f32 %v810, %v811
    %v813 = vrot.slane %v812, 1
    %v814 = vadd.f32 %v812, %v813
    %vm815 = vcmask 1040384
    %v816 = vsel %vm815, %v777, %v814
    %v817 = vmul.f32 %v816, 0.00390625
    %v818 = vld [vmem:[%s3] sm:$0xff]
    %v819 = vld [vmem:[%s3 + $0x8] sm:$0xff]
    %v820 = vld [vmem:[%s3 + $0x10] sm:$0xff]
    %v821 = vld [vmem:[%s3 + $0x18] sm:$0xff]
    %v822 = vld [vmem:[%s3 + $0x20] sm:$0xff]
    %v823 = vld [vmem:[%s3 + $0x28] sm:$0xff]
    %v824 = vld [vmem:[%s3 + $0x30] sm:$0xff]
    %v825 = vld [vmem:[%s3 + $0x38] sm:$0xff]
    %v826 = vld [vmem:[%s3 + $0x40] sm:$0xff]
    %v827 = vld [vmem:[%s3 + $0x48] sm:$0xff]
    %v828 = vld [vmem:[%s3 + $0x50] sm:$0xff]
    %v829 = vld [vmem:[%s3 + $0x58] sm:$0xff]
    %v830 = vld [vmem:[%s3 + $0x60] sm:$0xff]
    %v831 = vld [vmem:[%s3 + $0x68] sm:$0xff]
    %v832 = vld [vmem:[%s3 + $0x70] sm:$0xff]
    %v833 = vld [vmem:[%s3 + $0x78] sm:$0xff]
    %v834 = vld [vmem:[%s4] sm:$0x1]
    %v836 = vlaneseq
    %v837 = vshrl.u32 %v836, 7
    %v838 = vsub.s32 0, %v837
    %v839 = vrot.slane %v834, %v838
    %841 = vmatprep.subr.mxu0 0.0
    %842 = vmatpush1.msra.mxu0 %v818
    %843 = vmatprep.subr.mxu0 0.0
    %844 = vmatpush1.msra.mxu0 %v819
    %845 = vmatprep.subr.mxu0 0.0
    %846 = vmatpush1.msra.mxu0 %v820
    %847 = vmatprep.subr.mxu0 0.0
    %848 = vmatpush1.msra.mxu0 %v821
    %849 = vmatprep.subr.mxu0 0.0
    %850 = vmatpush1.msra.mxu0 %v822
    %851 = vmatprep.subr.mxu0 0.0
    %852 = vmatpush1.msra.mxu0 %v823
    %853 = vmatprep.subr.mxu0 0.0
    %854 = vmatpush1.msra.mxu0 %v824
    %855 = vmatprep.subr.mxu0 0.0
    %856 = vmatpush1.msra.mxu0 %v825
    %857 = vmatprep.subr.mxu0 0.0
    %858 = vmatpush1.msra.mxu0 %v826
    %859 = vmatprep.subr.mxu0 0.0
    %860 = vmatpush1.msra.mxu0 %v827
    %861 = vmatprep.subr.mxu0 0.0
    %862 = vmatpush1.msra.mxu0 %v828
    %863 = vmatprep.subr.mxu0 0.0
    %864 = vmatpush1.msra.mxu0 %v829
    %865 = vmatprep.subr.mxu0 0.0
    %866 = vmatpush1.msra.mxu0 %v830
    %867 = vmatprep.subr.mxu0 0.0
    %868 = vmatpush1.msra.mxu0 %v831
    %869 = vmatprep.subr.mxu0 0.0
    %870 = vmatpush1.msra.mxu0 %v832
    %871 = vmatprep.subr.mxu0 0.0
    %872 = vmatpush1.msra.mxu0 %v833
    %873 = vmatprep.subr.mxu0 0.0
    %874 = vmatpush1.msra.mxu0 0.0
    %875 = vmatprep.subr.mxu0 0.0
    %876 = vmatpush1.msra.mxu0 0.0
    %877 = vmatprep.subr.mxu0 0.0
    %878 = vmatpush1.msra.mxu0 0.0
    %879 = vmatprep.subr.mxu0 0.0
    %880 = vmatpush1.msra.mxu0 0.0
    %881 = vmatprep.subr.mxu0 0.0
    %882 = vmatpush1.msra.mxu0 0.0
    %883 = vmatprep.subr.mxu0 0.0
    %884 = vmatpush1.msra.mxu0 0.0
    %885 = vmatprep.subr.mxu0 0.0
    %886 = vmatpush1.msra.mxu0 0.0
    %887 = vmatprep.subr.mxu0 0.0
    %888 = vmatpush1.msra.mxu0 0.0
    %889 = vmatprep.subr.mxu0 0.0
    %890 = vmatpush1.msra.mxu0 0.0
    %891 = vmatprep.subr.mxu0 0.0
    %892 = vmatpush1.msra.mxu0 0.0
    %893 = vmatprep.subr.mxu0 0.0
    %894 = vmatpush1.msra.mxu0 0.0
    %895 = vmatprep.subr.mxu0 0.0
    %896 = vmatpush1.msra.mxu0 0.0
    %897 = vmatprep.subr.mxu0 0.0
    %898 = vmatpush1.msra.mxu0 0.0
    %899 = vmatprep.subr.mxu0 0.0
    %900 = vmatpush1.msra.mxu0 0.0
    %901 = vmatprep.subr.mxu0 0.0
    %902 = vmatpush1.msra.mxu0 0.0
    %903 = vmatprep.subr.mxu0 0.0
    %904 = vmatpush1.msra.mxu0 0.0
    %905 = vmatprep.mubr.f32.mxu0 0.0
    %906 = vmatmul.mubr.f32.gmra.mrb[0].mxu0 %v817
    %v907 = vpop.f32.mrb[0].mxu0
    %v908 = vadd.f32 %v839, %v907
    %v909 = vpop.f32.mrb[0].mxu0
    %910 = vdwg.mxu0
    %911 = vst [vmem:[#allocation4] sm:$0x3] %v817
    %912 = vst [vmem:[#allocation2] sm:$0x3] %v908
    // Predicated region
    $region22: #{tpu_custom_call.1} parent=1 // pred_check
      _
    $region23: #{tpu_custom_call.1} parent=1 // pred_check_branch
      %914 = sbr.rel (0) target = $region25
    $region24: #{tpu_custom_call.1} parent=1 // pred_region
      %s916 = ssub.s32 32, 32
      %917 = vsyncadd [#allocation3], %s916
      %s919 = sshll.u32 [#allocation2], 4
      %s920 = int_to_ptr.vmem [resolvable:$true] %s919
      %922 = dma.vmem_to_hbm [thread:$0]  %s920, 32, %s5, [#allocation3]
    $region25: #{tpu_custom_call.1} parent=1 // pred_fallthru
      _
    // Predicated region
    $region26: #{tpu_custom_call.1} parent=1 // pred_check
      _
    $region27: #{tpu_custom_call.1} parent=1 // pred_check_branch
      %924 = sbr.rel (0) target = $region29
    $region28: #{tpu_custom_call.1} parent=1 // pred_region
      %s926 = ssub.s32 32, 32
      %927 = vsyncadd [#allocation5], %s926
      %s929 = sshll.u32 [#allocation4], 4
      %s930 = int_to_ptr.vmem [resolvable:$true] %s929
      %932 = dma.vmem_to_hbm [thread:$0]  %s930, 32, %s6, [#allocation5]
    $region29: #{tpu_custom_call.1} parent=1 // pred_fallthru
      _
    // Predicated region
    $region30: #{tpu_custom_call.1} parent=1 // pred_check
      _
    $region31: #{tpu_custom_call.1} parent=1 // pred_check_branch
      %934 = sbr.rel (0) target = $region33
    $region32: #{tpu_custom_call.1} parent=1 // pred_region
      %935 = dma.done [#allocation3], 32
    $region33: #{tpu_custom_call.1} parent=1 // pred_fallthru
      _
    // Predicated region
    $region34: #{tpu_custom_call.1} parent=1 // pred_check
      _
    $region35: #{tpu_custom_call.1} parent=1 // pred_check_branch
      %937 = sbr.rel (0) target = $region37
    $region36: #{tpu_custom_call.1} parent=1 // pred_region
      %938 = dma.done [#allocation5], 32
    $region37: #{tpu_custom_call.1} parent=1 // pred_fallthru
      _
    %939 = vsyncpa [#allocation3], 1
    %940 = vsyncpa [#allocation5], 1

</llo_original>
